<compile_context>
chip_gen: v7x
topology: tpu7x:2x2x1
jax: 0.10.0
libtpu: 0.0.40
codegen_flags: <defaults>
</compile_context>

<pallas_src>
import functools

import jax
import jax.numpy as jnp
from jax import lax
from jax.experimental import pallas as pl
from jax.experimental.pallas import tpu as pltpu

LANE = 128     # f32 lane width of a vreg
SUBLANE = 8    # f32 sublane count of a vreg


def _round_up(n, m):
    return ((n + m - 1) // m) * m


# --------------------------------------------------------------------------
# Kernel: all three heads in one shot.
# --------------------------------------------------------------------------
def _fused_heads_kernel(x_ref, w1_ref, b1_ref, w2_ref, b2_ref, o_ref,
                        *, head_bounds):
    """ReLU(x@W1f+b1f) @ W2f(block-diag) + b2f, then a masked softmax per head
    on its lane sub-range of the single lane-dense (tile_b, 128) output."""
    x = x_ref[...]                                                     # (B, D)
    h = jnp.dot(x, w1_ref[...], preferred_element_type=jnp.float32)   # (B, Hp)
    h = jnp.maximum(h + b1_ref[...], 0.0)                             # ReLU
    # TODO(synk): dropout omitted (inference-mode identity).
    logits = jnp.dot(h, w2_ref[...],
                     preferred_element_type=jnp.float32) + b2_ref[...]  # (B, Cp)

    lane = lax.broadcasted_iota(jnp.int32, logits.shape, 1)
    probs = jnp.zeros_like(logits)
    for start, stop in head_bounds:          # 3 heads, statically unrolled
        mask = (lane >= start) & (lane < stop)
        masked = jnp.where(mask, logits, jnp.float32(-1e30))
        m = jnp.max(masked, axis=-1, keepdims=True)
        e = jnp.exp(masked - m)              # exactly 0 outside [start, stop)
        s = jnp.sum(e, axis=-1, keepdims=True)
        probs = probs + e * pl.reciprocal(s, approx=True)   # EUP, not VALU div
    o_ref[...] = probs                       # single unmasked 128-lane store


def fused_heads(x, w1_f, b1_f, w2_f, b2_f, head_bounds, *, max_tile_b=512):
    """One pallas_call for all three heads. Returns the (B, 128) prob slab."""
    B, D = x.shape
    H_pad = w1_f.shape[1]
    C_pad = w2_f.shape[1]

    # Sublane-aligned batch tiles; weights are grid-invariant (stay resident).
    # max_tile_b=512 keeps double-buffered (x, out) tiles + weights far under
    # the 32 MiB scoped-VMEM default (also safe for v7x's 64 MiB physical VMEM).
    tile_b = min(max_tile_b, _round_up(B, SUBLANE))
    B_pad = _round_up(B, tile_b)
    if B_pad != B:
        x = jnp.pad(x, ((0, B_pad - B), (0, 0)))
    grid = (B_pad // tile_b,)

    flops = 2 * B_pad * D * H_pad + 2 * B_pad * H_pad * C_pad
    bytes_accessed = 4 * (B_pad * D + D * H_pad + H_pad
                          + H_pad * C_pad + C_pad + B_pad * C_pad)

    kernel = functools.partial(_fused_heads_kernel, head_bounds=head_bounds)
    out = pl.pallas_call(
        kernel,
        out_shape=jax.ShapeDtypeStruct((B_pad, C_pad), jnp.float32),
        grid_spec=pltpu.PrefetchScalarGridSpec(
            num_scalar_prefetch=0,
            grid=grid,
            in_specs=[
                pl.BlockSpec((tile_b, D), lambda i: (i, 0)),
                pl.BlockSpec((D, H_pad), lambda i: (0, 0)),
                pl.BlockSpec((1, H_pad), lambda i: (0, 0)),
                pl.BlockSpec((H_pad, C_pad), lambda i: (0, 0)),
                pl.BlockSpec((1, C_pad), lambda i: (0, 0)),
            ],
            out_specs=pl.BlockSpec((tile_b, C_pad), lambda i: (i, 0)),
        ),
        compiler_params=pltpu.CompilerParams(
            dimension_semantics=("parallel",)),   # batch tiles -> both TCs on v7x
        cost_estimate=pl.CostEstimate(
            flops=flops,
            transcendentals=len(head_bounds) * B_pad * C_pad,
            bytes_accessed=bytes_accessed),
    )(x, w1_f, b1_f, w2_f, b2_f)
    return out[:B]


# --------------------------------------------------------------------------
# Host-side parameter construction (PyTorch nn.Linear default init).
# --------------------------------------------------------------------------
def _init_linear(key, in_features, out_features):
    """PyTorch nn.Linear default init: U(-1/sqrt(in), 1/sqrt(in)); stored as
    (in, out) so the kernel computes x @ W."""
    k_w, k_b = jax.random.split(key)
    bound = 1.0 / jnp.sqrt(jnp.float32(in_features))
    w = jax.random.uniform(k_w, (out_features, in_features), jnp.float32,
                           -bound, bound).T
    b = jax.random.uniform(k_b, (1, out_features), jnp.float32, -bound, bound)
    return w, b


class TripletFacenetClassifierPallas:
    """Pallas implementation of TripletFacenetClassifier.forward (eval mode)."""

    N_CLASSES = (10, 4, 2)   # st, age, gender

    def __init__(self, input_dim, st_dims=(600,), age_dims=(400,),
                 gender_dims=(400,), st_dropout=0.2, age_dropout=0.2,
                 gender_dropout=0.2, seed=0):
        del st_dropout, age_dropout, gender_dropout   # identity in eval mode
        head_dims = (tuple(st_dims), tuple(age_dims), tuple(gender_dims))
        for dims in head_dims:
            # TODO(synk): fused kernel supports the default single-hidden-layer
            # make_output config; deeper heads would need per-layer fusion.
            assert len(dims) == 1, "fused kernel supports one hidden layer/head"

        keys = jax.random.split(jax.random.PRNGKey(seed), 3)
        per_head = []
        for k, dims, n_cls in zip(keys, head_dims, self.N_CLASSES):
            k1, k2 = jax.random.split(k)
            w1, b1 = _init_linear(k1, input_dim, dims[0])
            w2, b2 = _init_linear(k2, dims[0], n_cls)
            per_head.append((w1, b1, w2, b2))
        self.per_head = per_head   # kept for the pure-JAX reference path

        # ---- fuse + zero-pad to 128-lane multiples (done once, host side) ----
        hidden = [p[0].shape[1] for p in per_head]
        H_pad = _round_up(sum(hidden), LANE)
        C_pad = _round_up(sum(self.N_CLASSES), LANE)

        w1_f = jnp.zeros((input_dim, H_pad), jnp.float32)
        b1_f = jnp.zeros((1, H_pad), jnp.float32)
        w2_f = jnp.zeros((H_pad, C_pad), jnp.float32)   # block-diagonal
        b2_f = jnp.zeros((1, C_pad), jnp.float32)
        bounds = []
        h_off = c_off = 0
        for (w1, b1, w2, b2), n_cls in zip(per_head, self.N_CLASSES):
            h = w1.shape[1]
            w1_f = w1_f.at[:, h_off:h_off + h].set(w1)
            b1_f = b1_f.at[:, h_off:h_off + h].set(b1)
            w2_f = w2_f.at[h_off:h_off + h, c_off:c_off + n_cls].set(w2)
            b2_f = b2_f.at[:, c_off:c_off + n_cls].set(b2)
            bounds.append((c_off, c_off + n_cls))
            h_off += h
            c_off += n_cls
        self.w1_f, self.b1_f, self.w2_f, self.b2_f = w1_f, b1_f, w2_f, b2_f
        self.head_bounds = tuple(bounds)

    def __call__(self, x):
        slab = fused_heads(x, self.w1_f, self.b1_f, self.w2_f, self.b2_f,
                           self.head_bounds)
        return [slab[:, s:e] for s, e in self.head_bounds]

    def reference(self, x):
        """Pure-JAX reference of the PyTorch forward (eval mode)."""
        outs = []
        for w1, b1, w2, b2 in self.per_head:
            h = jnp.maximum(x @ w1 + b1, 0.0)
            outs.append(jax.nn.softmax(h @ w2 + b2, axis=-1))
        return outs


if __name__ == "__main__":
    batch = 4
    input_dim = 32

    model = TripletFacenetClassifierPallas(
        input_dim, st_dims=(64,), age_dims=(48,), gender_dims=(32,), seed=0)

    x = jax.random.normal(jax.random.PRNGKey(0), (batch, input_dim),
                          dtype=jnp.float32)

    outs = model(x)
    outs = [jax.block_until_ready(o) for o in outs]

    # sanity checks: shapes, softmax rows ~1, and match vs pure-JAX reference
    # (tolerance loosened slightly for the approx EUP reciprocal).
    assert outs[0].shape == (batch, 10)
    assert outs[1].shape == (batch, 4)
    assert outs[2].shape == (batch, 2)
    refs = model.reference(x)
    for o, r in zip(outs, refs):
        assert bool(jnp.allclose(jnp.sum(o, axis=-1), 1.0, atol=1e-2))
        assert bool(jnp.allclose(o, r, atol=1e-2))

    print("KERNEL_OK")
</pallas_src>

<mosaic_0001>
module attributes {stable_mosaic.version = 11 : i64} {
  func.func @_fused_heads_kernel(%arg0: i32, %arg1: memref<8x32xf32, #tpu.memory_space<vmem>>, %arg2: memref<32x256xf32, #tpu.memory_space<vmem>>, %arg3: memref<1x256xf32, #tpu.memory_space<vmem>>, %arg4: memref<256x128xf32, #tpu.memory_space<vmem>>, %arg5: memref<1x128xf32, #tpu.memory_space<vmem>>, %arg6: memref<8x128xf32, #tpu.memory_space<vmem>>) attributes {dimension_semantics = [#tpu.dimension_semantics<parallel>], iteration_bounds = array<i64: 1>, scalar_prefetch = 0 : i64, scratch_operands = 0 : i64, tpu.core_type = #tpu.core_type<tc>, window_params = [{transform_indices = @transform_0, window_bounds = array<i64: 8, 32>}, {pipeline_mode = #tpu.pipeline_mode<synchronous>, transform_indices = @transform_1, window_bounds = array<i64: 32, 256>}, {pipeline_mode = #tpu.pipeline_mode<synchronous>, transform_indices = @transform_2, window_bounds = array<i64: 1, 256>}, {pipeline_mode = #tpu.pipeline_mode<synchronous>, transform_indices = @transform_3, window_bounds = array<i64: 256, 128>}, {pipeline_mode = #tpu.pipeline_mode<synchronous>, transform_indices = @transform_4, window_bounds = array<i64: 1, 128>}, {transform_indices = @transform_5, window_bounds = array<i64: 8, 128>}]} {
    %c0 = arith.constant 0 : index
    %c0_0 = arith.constant 0 : index
    %0 = vector.load %arg1[%c0, %c0_0] : memref<8x32xf32, #tpu.memory_space<vmem>>, vector<8x32xf32>
    %c0_1 = arith.constant 0 : index
    %c0_2 = arith.constant 0 : index
    %1 = vector.load %arg2[%c0_1, %c0_2] : memref<32x256xf32, #tpu.memory_space<vmem>>, vector<32x256xf32>
    %cst = arith.constant dense<0.000000e+00> : vector<8x256xf32>
    %2 = tpu.matmul %0, %1, %cst {dimension_numbers = #tpu.dot_dimension_numbers<[1], [0], [0], [1], [0, 0, 1, 1], [], []>} : vector<8x32xf32>, vector<32x256xf32>, vector<8x256xf32> -> vector<8x256xf32>
    %c0_3 = arith.constant 0 : index
    %c0_4 = arith.constant 0 : index
    %3 = vector.load %arg3[%c0_3, %c0_4] : memref<1x256xf32, #tpu.memory_space<vmem>>, vector<1x256xf32>
    %4 = vector.broadcast %3 : vector<1x256xf32> to vector<8x256xf32>
    %5 = arith.addf %2, %4 : vector<8x256xf32>
    %cst_5 = arith.constant 0.000000e+00 : f32
    %6 = vector.broadcast %cst_5 : f32 to vector<8x256xf32>
    %7 = arith.maximumf %5, %6 : vector<8x256xf32>
    %c0_6 = arith.constant 0 : index
    %c0_7 = arith.constant 0 : index
    %8 = vector.load %arg4[%c0_6, %c0_7] : memref<256x128xf32, #tpu.memory_space<vmem>>, vector<256x128xf32>
    %cst_8 = arith.constant dense<0.000000e+00> : vector<8x128xf32>
    %9 = tpu.matmul %7, %8, %cst_8 {dimension_numbers = #tpu.dot_dimension_numbers<[1], [0], [0], [1], [0, 0, 1, 1], [], []>} : vector<8x256xf32>, vector<256x128xf32>, vector<8x128xf32> -> vector<8x128xf32>
    %c0_9 = arith.constant 0 : index
    %c0_10 = arith.constant 0 : index
    %10 = vector.load %arg5[%c0_9, %c0_10] : memref<1x128xf32, #tpu.memory_space<vmem>>, vector<1x128xf32>
    %11 = vector.broadcast %10 : vector<1x128xf32> to vector<8x128xf32>
    %12 = arith.addf %9, %11 : vector<8x128xf32>
    %13 = tpu.iota {dimensions = array<i32: 1>} : vector<8x128xi32>
    %cst_11 = arith.constant 0.000000e+00 : f32
    %14 = vector.broadcast %cst_11 : f32 to vector<8x128xf32>
    %c0_i32 = arith.constant 0 : i32
    %15 = vector.broadcast %c0_i32 : i32 to vector<8x128xi32>
    %16 = arith.cmpi sge, %13, %15 : vector<8x128xi32>
    %c10_i32 = arith.constant 10 : i32
    %17 = vector.broadcast %c10_i32 : i32 to vector<8x128xi32>
    %18 = arith.cmpi slt, %13, %17 : vector<8x128xi32>
    %19 = arith.andi %16, %18 : vector<8x128xi1>
    %cst_12 = arith.constant -1.000000e+30 : f32
    %20 = vector.broadcast %cst_12 : f32 to vector<8x128xf32>
    %21 = arith.select %19, %12, %20 : vector<8x128xi1>, vector<8x128xf32>
    %cst_13 = arith.constant dense<0xFF800000> : vector<8xf32>
    %22 = vector.multi_reduction <maximumf>, %21, %cst_13 [1] : vector<8x128xf32> to vector<8xf32>
    %23 = vector.shape_cast %22 : vector<8xf32> to vector<8x1xf32>
    %24 = vector.broadcast %23 : vector<8x1xf32> to vector<8x128xf32>
    %25 = arith.subf %21, %24 : vector<8x128xf32>
    %26 = math.exp %25 : vector<8x128xf32>
    %cst_14 = arith.constant dense<0.000000e+00> : vector<8xf32>
    %27 = vector.multi_reduction <add>, %26, %cst_14 [1] : vector<8x128xf32> to vector<8xf32>
    %28 = vector.shape_cast %27 : vector<8xf32> to vector<8x1xf32>
    %29 = tpu.reciprocal %28 {approx = true} : vector<8x1xf32> -> vector<8x1xf32>
    %30 = vector.broadcast %29 : vector<8x1xf32> to vector<8x128xf32>
    %31 = arith.mulf %26, %30 : vector<8x128xf32>
    %32 = arith.addf %14, %31 : vector<8x128xf32>
    %c10_i32_15 = arith.constant 10 : i32
    %33 = vector.broadcast %c10_i32_15 : i32 to vector<8x128xi32>
    %34 = arith.cmpi sge, %13, %33 : vector<8x128xi32>
    %c14_i32 = arith.constant 14 : i32
    %35 = vector.broadcast %c14_i32 : i32 to vector<8x128xi32>
    %36 = arith.cmpi slt, %13, %35 : vector<8x128xi32>
    %37 = arith.andi %34, %36 : vector<8x128xi1>
    %cst_16 = arith.constant -1.000000e+30 : f32
    %38 = vector.broadcast %cst_16 : f32 to vector<8x128xf32>
    %39 = arith.select %37, %12, %38 : vector<8x128xi1>, vector<8x128xf32>
    %cst_17 = arith.constant dense<0xFF800000> : vector<8xf32>
    %40 = vector.multi_reduction <maximumf>, %39, %cst_17 [1] : vector<8x128xf32> to vector<8xf32>
    %41 = vector.shape_cast %40 : vector<8xf32> to vector<8x1xf32>
    %42 = vector.broadcast %41 : vector<8x1xf32> to vector<8x128xf32>
    %43 = arith.subf %39, %42 : vector<8x128xf32>
    %44 = math.exp %43 : vector<8x128xf32>
    %cst_18 = arith.constant dense<0.000000e+00> : vector<8xf32>
    %45 = vector.multi_reduction <add>, %44, %cst_18 [1] : vector<8x128xf32> to vector<8xf32>
    %46 = vector.shape_cast %45 : vector<8xf32> to vector<8x1xf32>
    %47 = tpu.reciprocal %46 {approx = true} : vector<8x1xf32> -> vector<8x1xf32>
    %48 = vector.broadcast %47 : vector<8x1xf32> to vector<8x128xf32>
    %49 = arith.mulf %44, %48 : vector<8x128xf32>
    %50 = arith.addf %32, %49 : vector<8x128xf32>
    %c14_i32_19 = arith.constant 14 : i32
    %51 = vector.broadcast %c14_i32_19 : i32 to vector<8x128xi32>
    %52 = arith.cmpi sge, %13, %51 : vector<8x128xi32>
    %c16_i32 = arith.constant 16 : i32
    %53 = vector.broadcast %c16_i32 : i32 to vector<8x128xi32>
    %54 = arith.cmpi slt, %13, %53 : vector<8x128xi32>
    %55 = arith.andi %52, %54 : vector<8x128xi1>
    %cst_20 = arith.constant -1.000000e+30 : f32
    %56 = vector.broadcast %cst_20 : f32 to vector<8x128xf32>
    %57 = arith.select %55, %12, %56 : vector<8x128xi1>, vector<8x128xf32>
    %cst_21 = arith.constant dense<0xFF800000> : vector<8xf32>
    %58 = vector.multi_reduction <maximumf>, %57, %cst_21 [1] : vector<8x128xf32> to vector<8xf32>
    %59 = vector.shape_cast %58 : vector<8xf32> to vector<8x1xf32>
    %60 = vector.broadcast %59 : vector<8x1xf32> to vector<8x128xf32>
    %61 = arith.subf %57, %60 : vector<8x128xf32>
    %62 = math.exp %61 : vector<8x128xf32>
    %cst_22 = arith.constant dense<0.000000e+00> : vector<8xf32>
    %63 = vector.multi_reduction <add>, %62, %cst_22 [1] : vector<8x128xf32> to vector<8xf32>
    %64 = vector.shape_cast %63 : vector<8xf32> to vector<8x1xf32>
    %65 = tpu.reciprocal %64 {approx = true} : vector<8x1xf32> -> vector<8x1xf32>
    %66 = vector.broadcast %65 : vector<8x1xf32> to vector<8x128xf32>
    %67 = arith.mulf %62, %66 : vector<8x128xf32>
    %68 = arith.addf %50, %67 : vector<8x128xf32>
    %c0_23 = arith.constant 0 : index
    %c0_24 = arith.constant 0 : index
    %69 = vector.load %arg6[%c0_23, %c0_24] : memref<8x128xf32, #tpu.memory_space<vmem>>, vector<8x128xf32>
    tpu.vector_store %arg6[%c0_23, %c0_24], %68 {strides = array<i32>} : memref<8x128xf32, #tpu.memory_space<vmem>>, vector<8x128xf32>,
    return
  }
  func.func @transform_0(%arg0: i32) -> (i32, i32) {
    %c0_i32 = arith.constant 0 : i32
    %c0_i32_0 = arith.constant 0 : i32
    return %arg0, %c0_i32 : i32, i32
  }
  func.func @transform_1(%arg0: i32) -> (i32, i32) {
    %c0_i32 = arith.constant 0 : i32
    %c0_i32_0 = arith.constant 0 : i32
    %c0_i32_1 = arith.constant 0 : i32
    return %c0_i32, %c0_i32_0 : i32, i32
  }
  func.func @transform_2(%arg0: i32) -> (i32, i32) {
    %c0_i32 = arith.constant 0 : i32
    %c0_i32_0 = arith.constant 0 : i32
    %c0_i32_1 = arith.constant 0 : i32
    return %c0_i32, %c0_i32_0 : i32, i32
  }
  func.func @transform_3(%arg0: i32) -> (i32, i32) {
    %c0_i32 = arith.constant 0 : i32
    %c0_i32_0 = arith.constant 0 : i32
    %c0_i32_1 = arith.constant 0 : i32
    return %c0_i32, %c0_i32_0 : i32, i32
  }
  func.func @transform_4(%arg0: i32) -> (i32, i32) {
    %c0_i32 = arith.constant 0 : i32
    %c0_i32_0 = arith.constant 0 : i32
    %c0_i32_1 = arith.constant 0 : i32
    return %c0_i32, %c0_i32_0 : i32, i32
  }
  func.func @transform_5(%arg0: i32) -> (i32, i32) {
    %c0_i32 = arith.constant 0 : i32
    %c0_i32_0 = arith.constant 0 : i32
    return %arg0, %c0_i32 : i32, i32
  }
}

</mosaic_0001>

<llo_original>
// kernel: tpu_custom_call.1
$region0: #{tpu_custom_call.1}
  #allocation0 [shape = 'u32[]', space=smem, size = 0x4, offset = 0x4, fixed_abs, tag = 'smem constant byte address 0x4 - core index']
  #allocation1 [shape = 'u32[144,128]{1,0:T(1,128)}', space=vmem, size = 0x12000, scoped, tag = 'internal scratch']
  %s0 = inlined_call_operand.hbm [shape: f32[8,32], index: 0, kind: input, shape index: {}]
  %s1 = inlined_call_operand.hbm [shape: f32[32,256], index: 1, kind: input, shape index: {}]
  %s2 = inlined_call_operand.vmem [shape: f32[1,256], index: 2, kind: input, shape index: {}]
  %s3 = inlined_call_operand.hbm [shape: f32[256,128], index: 3, kind: input, shape index: {}]
  %s4 = inlined_call_operand.vmem [shape: f32[1,128], index: 4, kind: input, shape index: {}]
  %s5 = inlined_call_operand.hbm [shape: f32[8,128], index: 5, kind: output, shape index: {}]
  %s6 = sld [smem:[#allocation0]]
  $region42: #{tpu_custom_call.1} parent=0
    _
  %s8 = ssub.s32 1, %s6
  %s9 = scalar_select 0, %s8, %s6
  $region1: #{tpu_custom_call.1} parent=0
    #allocation2 [shape = 'u8[4096]{0}', space=vmem, size = 0x1000, scoped, tag = 'input window, operand 0, single buffered']
    #allocation3 [shape = 's32[1]{0}', space=sflag, size = 0x4, scoped, tag = 'scoped memory for tpu_custom_call.1']
    #allocation4 [shape = 's32[1]{0}', space=sflag, size = 0x4, scoped, tag = 'scoped memory for tpu_custom_call.1']
    #allocation5 [shape = 'u8[32768]{0}', space=vmem, size = 0x8000, scoped, tag = 'input window, operand 1, single buffered']
    #allocation6 [shape = 's32[1]{0}', space=sflag, size = 0x4, scoped, tag = 'scoped memory for tpu_custom_call.1']
    #allocation7 [shape = 'u8[131072]{0}', space=vmem, size = 0x20000, scoped, tag = 'input window, operand 3, single buffered']
    #allocation8 [shape = 'u8[4096]{0}', space=vmem, size = 0x1000, scoped, tag = 'output window, operand 0, single buffered']
    %10 = vsyncpa [#allocation3], 0
    %11 = vsyncpa [#allocation6], 0
    %12 = vsyncpa [#allocation4], 0
    // Predicated region
    $region2: #{tpu_custom_call.1} parent=1 // pred_check
      _
    $region3: #{tpu_custom_call.1} parent=1 // pred_check_branch
      %14 = sbr.rel (0) target = $region5
    $region4: #{tpu_custom_call.1} parent=1 // pred_region
      %s16 = ssub.s32 128, 128
      %17 = vsyncadd [#allocation3], %s16
      %s19 = sshll.u32 [#allocation2], 4
      %s20 = int_to_ptr.vmem [resolvable:$true] %s19
      %22 = dma.hbm_to_vmem [thread:$0]  %s0, 128, %s20, [#allocation3]
    $region5: #{tpu_custom_call.1} parent=1 // pred_fallthru
      _
    // Predicated region
    $region6: #{tpu_custom_call.1} parent=1 // pred_check
      _
    $region7: #{tpu_custom_call.1} parent=1 // pred_check_branch
      %24 = sbr.rel (0) target = $region9
    $region8: #{tpu_custom_call.1} parent=1 // pred_region
      %s26 = ssub.s32 1024, 1024
      %27 = vsyncadd [#allocation6], %s26
      %s28 = sshll.u32 [#allocation5], 4
      %s29 = int_to_ptr.vmem [resolvable:$true] %s28
      %34 = dma.hbm_to_vmem [thread:$0]  %s1, 1024, %s29, [#allocation6], 256, 256, 16
    $region9: #{tpu_custom_call.1} parent=1 // pred_fallthru
      _
    // Predicated region
    $region10: #{tpu_custom_call.1} parent=1 // pred_check
      _
    $region11: #{tpu_custom_call.1} parent=1 // pred_check_branch
      %36 = sbr.rel (0) target = $region13
    $region12: #{tpu_custom_call.1} parent=1 // pred_region
      _
    $region13: #{tpu_custom_call.1} parent=1 // pred_fallthru
      _
    // Predicated region
    $region14: #{tpu_custom_call.1} parent=1 // pred_check
      _
    $region15: #{tpu_custom_call.1} parent=1 // pred_check_branch
      %38 = sbr.rel (0) target = $region17
    $region16: #{tpu_custom_call.1} parent=1 // pred_region
      %s40 = ssub.s32 4096, 4096
      %41 = vsyncadd [#allocation6], %s40
      %s42 = sshll.u32 [#allocation7], 4
      %s43 = int_to_ptr.vmem [resolvable:$true] %s42
      %48 = dma.hbm_to_vmem [thread:$0]  %s3, 4096, %s43, [#allocation6], 128, 128, 8
    $region17: #{tpu_custom_call.1} parent=1 // pred_fallthru
      _
    // Predicated region
    $region18: #{tpu_custom_call.1} parent=1 // pred_check
      _
    $region19: #{tpu_custom_call.1} parent=1 // pred_check_branch
      %50 = sbr.rel (0) target = $region21
    $region20: #{tpu_custom_call.1} parent=1 // pred_region
      _
    $region21: #{tpu_custom_call.1} parent=1 // pred_fallthru
      _
    // Predicated region
    $region22: #{tpu_custom_call.1} parent=1 // pred_check
      _
    $region23: #{tpu_custom_call.1} parent=1 // pred_check_branch
      %52 = sbr.rel (0) target = $region25
    $region24: #{tpu_custom_call.1} parent=1 // pred_region
      %53 = dma.done [#allocation3], 128
    $region25: #{tpu_custom_call.1} parent=1 // pred_fallthru
      _
    // Predicated region
    $region26: #{tpu_custom_call.1} parent=1 // pred_check
      _
    $region27: #{tpu_custom_call.1} parent=1 // pred_check_branch
      %55 = sbr.rel (0) target = $region29
    $region28: #{tpu_custom_call.1} parent=1 // pred_region
      %56 = dma.done [#allocation6], 1024
    $region29: #{tpu_custom_call.1} parent=1 // pred_fallthru
      _
    // Predicated region
    $region30: #{tpu_custom_call.1} parent=1 // pred_check
      _
    $region31: #{tpu_custom_call.1} parent=1 // pred_check_branch
      %58 = sbr.rel (0) target = $region33
    $region32: #{tpu_custom_call.1} parent=1 // pred_region
      %59 = dma.done [#allocation6], 4096
    $region33: #{tpu_custom_call.1} parent=1 // pred_fallthru
      _
    %v60 = vld [vmem:[#allocation2] sm:$0xff]
    %v61 = vld [vmem:[#allocation5] sm:$0xff]
    %v62 = vld [vmem:[#allocation5 + $0x8] sm:$0xff]
    %v63 = vld [vmem:[#allocation5 + $0x10] sm:$0xff]
    %v64 = vld [vmem:[#allocation5 + $0x18] sm:$0xff]
    %v65 = vld [vmem:[#allocation5 + $0x20] sm:$0xff]
    %v66 = vld [vmem:[#allocation5 + $0x28] sm:$0xff]
    %v67 = vld [vmem:[#allocation5 + $0x30] sm:$0xff]
    %v68 = vld [vmem:[#allocation5 + $0x38] sm:$0xff]
    %v69 = vld [vmem:[%s2] sm:$0x3]
    %v71 = vlaneseq
    %v72 = vshrl.u32 %v71, 7
    %v73 = vsub.s32 0, %v72
    %v74 = vrot.slane %v69, %v73
    %v75 = vlaneseq
    %v76 = vshrl.u32 %v75, 7
    %v77 = vsub.s32 1, %v76
    %v78 = vrot.slane %v69, %v77
    %vm81 = vcmask 261120
    %v83 = vsel %vm81, %v60, 0
    %85 = vmatprep.subr.mxu0 %v62
    %86 = vmatpush1.msra.mxu0 %v61
    %87 = vmatprep.subr.mxu0 %v64
    %88 = vmatpush1.msra.mxu0 %v63
    %89 = vmatprep.subr.mxu0 %v66
    %90 = vmatpush1.msra.mxu0 %v65
    %91 = vmatprep.subr.mxu0 %v68
    %92 = vmatpush1.msra.mxu0 %v67
    %93 = vmatprep.subr.mxu0 0.0
    %94 = vmatpush1.msra.mxu0 0.0
    %95 = vmatprep.subr.mxu0 0.0
    %96 = vmatpush1.msra.mxu0 0.0
    %97 = vmatprep.subr.mxu0 0.0
    %98 = vmatpush1.msra.mxu0 0.0
    %99 = vmatprep.subr.mxu0 0.0
    %100 = vmatpush1.msra.mxu0 0.0
    %101 = vmatprep.subr.mxu0 0.0
    %102 = vmatpush1.msra.mxu0 0.0
    %103 = vmatprep.subr.mxu0 0.0
    %104 = vmatpush1.msra.mxu0 0.0
    %105 = vmatprep.subr.mxu0 0.0
    %106 = vmatpush1.msra.mxu0 0.0
    %107 = vmatprep.subr.mxu0 0.0
    %108 = vmatpush1.msra.mxu0 0.0
    %109 = vmatprep.subr.mxu0 0.0
    %110 = vmatpush1.msra.mxu0 0.0
    %111 = vmatprep.subr.mxu0 0.0
    %112 = vmatpush1.msra.mxu0 0.0
    %113 = vmatprep.subr.mxu0 0.0
    %114 = vmatpush1.msra.mxu0 0.0
    %115 = vmatprep.subr.mxu0 0.0
    %116 = vmatpush1.msra.mxu0 0.0
    %117 = vmatprep.subr.mxu0 0.0
    %118 = vmatpush1.msra.mxu0 0.0
    %119 = vmatprep.subr.mxu0 0.0
    %120 = vmatpush1.msra.mxu0 0.0
    %121 = vmatprep.subr.mxu0 0.0
    %122 = vmatpush1.msra.mxu0 0.0
    %123 = vmatprep.subr.mxu0 0.0
    %124 = vmatpush1.msra.mxu0 0.0
    %125 = vmatprep.subr.mxu0 0.0
    %126 = vmatpush1.msra.mxu0 0.0
    %127 = vmatprep.subr.mxu0 0.0
    %128 = vmatpush1.msra.mxu0 0.0
    %129 = vmatprep.subr.mxu0 0.0
    %130 = vmatpush1.msra.mxu0 0.0
    %131 = vmatprep.subr.mxu0 0.0
    %132 = vmatpush1.msra.mxu0 0.0
    %133 = vmatprep.subr.mxu0 0.0
    %134 = vmatpush1.msra.mxu0 0.0
    %135 = vmatprep.subr.mxu0 0.0
    %136 = vmatpush1.msra.mxu0 0.0
    %137 = vmatprep.subr.mxu0 0.0
    %138 = vmatpush1.msra.mxu0 0.0
    %139 = vmatprep.subr.mxu0 0.0
    %140 = vmatpush1.msra.mxu0 0.0
    %141 = vmatprep.subr.mxu0 0.0
    %142 = vmatpush1.msra.mxu0 0.0
    %143 = vmatprep.subr.mxu0 0.0
    %144 = vmatpush1.msra.mxu0 0.0
    %145 = vmatprep.subr.mxu0 0.0
    %146 = vmatpush1.msra.mxu0 0.0
    %147 = vmatprep.subr.mxu0 0.0
    %148 = vmatpush1.msra.mxu0 0.0
    %149 = vmatprep.mubr.f32.mxu0 0.0
    %150 = vmatmul.mubr.f32.gmra.mrb[0].mxu0 %v83
    %v151 = vpop.f32.mrb[0].mxu0
    %v152 = vadd.f32 %v74, %v151
    %v153 = vpop.f32.mrb[0].mxu0
    %v154 = vadd.f32 %v78, %v153
    %155 = vdwg.mxu0
    %v156 = vmax.f32 %v152, 0.0
    %v157 = vmax.f32 %v154, 0.0
    %v158 = vld [vmem:[#allocation7] sm:$0xff]
    %v159 = vld [vmem:[#allocation7 + $0x8] sm:$0xff]
    %v160 = vld [vmem:[#allocation7 + $0x10] sm:$0xff]
    %v161 = vld [vmem:[#allocation7 + $0x18] sm:$0xff]
    %v162 = vld [vmem:[#allocation7 + $0x20] sm:$0xff]
    %v163 = vld [vmem:[#allocation7 + $0x28] sm:$0xff]
    %v164 = vld [vmem:[#allocation7 + $0x30] sm:$0xff]
    %v165 = vld [vmem:[#allocation7 + $0x38] sm:$0xff]
    %v166 = vld [vmem:[#allocation7 + $0x40] sm:$0xff]
    %v167 = vld [vmem:[#allocation7 + $0x48] sm:$0xff]
    %v168 = vld [vmem:[#allocation7 + $0x50] sm:$0xff]
    %v169 = vld [vmem:[#allocation7 + $0x58] sm:$0xff]
    %v170 = vld [vmem:[#allocation7 + $0x60] sm:$0xff]
    %v171 = vld [vmem:[#allocation7 + $0x68] sm:$0xff]
    %v172 = vld [vmem:[#allocation7 + $0x70] sm:$0xff]
    %v173 = vld [vmem:[#allocation7 + $0x78] sm:$0xff]
    %v174 = vld [vmem:[#allocation7 + $0x80] sm:$0xff]
    %v175 = vld [vmem:[#allocation7 + $0x88] sm:$0xff]
    %v176 = vld [vmem:[#allocation7 + $0x90] sm:$0xff]
    %v177 = vld [vmem:[#allocation7 + $0x98] sm:$0xff]
    %v178 = vld [vmem:[#allocation7 + $0xa0] sm:$0xff]
    %v179 = vld [vmem:[#allocation7 + $0xa8] sm:$0xff]
    %v180 = vld [vmem:[#allocation7 + $0xb0] sm:$0xff]
    %v181 = vld [vmem:[#allocation7 + $0xb8] sm:$0xff]
    %v182 = vld [vmem:[#allocation7 + $0xc0] sm:$0xff]
    %v183 = vld [vmem:[#allocation7 + $0xc8] sm:$0xff]
    %v184 = vld [vmem:[#allocation7 + $0xd0] sm:$0xff]
    %v185 = vld [vmem:[#allocation7 + $0xd8] sm:$0xff]
    %v186 = vld [vmem:[#allocation7 + $0xe0] sm:$0xff]
    %v187 = vld [vmem:[#allocation7 + $0xe8] sm:$0xff]
    %v188 = vld [vmem:[#allocation7 + $0xf0] sm:$0xff]
    %v189 = vld [vmem:[#allocation7 + $0xf8] sm:$0xff]
    %v190 = vld [vmem:[%s4] sm:$0x1]
    %v192 = vlaneseq
    %v193 = vshrl.u32 %v192, 7
    %v194 = vsub.s32 0, %v193
    %v195 = vrot.slane %v190, %v194
    %197 = vmatprep.subr.mxu0 0.0
    %198 = vmatpush1.msra.mxu0 %v158
    %199 = vmatprep.subr.mxu0 0.0
    %200 = vmatpush1.msra.mxu0 %v159
    %201 = vmatprep.subr.mxu0 0.0
    %202 = vmatpush1.msra.mxu0 %v160
    %203 = vmatprep.subr.mxu0 0.0
    %204 = vmatpush1.msra.mxu0 %v161
    %205 = vmatprep.subr.mxu0 0.0
    %206 = vmatpush1.msra.mxu0 %v162
    %207 = vmatprep.subr.mxu0 0.0
    %208 = vmatpush1.msra.mxu0 %v163
    %209 = vmatprep.subr.mxu0 0.0
    %210 = vmatpush1.msra.mxu0 %v164
    %211 = vmatprep.subr.mxu0 0.0
    %212 = vmatpush1.msra.mxu0 %v165
    %213 = vmatprep.subr.mxu0 0.0
    %214 = vmatpush1.msra.mxu0 %v166
    %215 = vmatprep.subr.mxu0 0.0
    %216 = vmatpush1.msra.mxu0 %v167
    %217 = vmatprep.subr.mxu0 0.0
    %218 = vmatpush1.msra.mxu0 %v168
    %219 = vmatprep.subr.mxu0 0.0
    %220 = vmatpush1.msra.mxu0 %v169
    %221 = vmatprep.subr.mxu0 0.0
    %222 = vmatpush1.msra.mxu0 %v170
    %223 = vmatprep.subr.mxu0 0.0
    %224 = vmatpush1.msra.mxu0 %v171
    %225 = vmatprep.subr.mxu0 0.0
    %226 = vmatpush1.msra.mxu0 %v172
    %227 = vmatprep.subr.mxu0 0.0
    %228 = vmatpush1.msra.mxu0 %v173
    %229 = vmatprep.subr.mxu0 0.0
    %230 = vmatpush1.msra.mxu0 %v174
    %231 = vmatprep.subr.mxu0 0.0
    %232 = vmatpush1.msra.mxu0 %v175
    %233 = vmatprep.subr.mxu0 0.0
    %234 = vmatpush1.msra.mxu0 %v176
    %235 = vmatprep.subr.mxu0 0.0
    %236 = vmatpush1.msra.mxu0 %v177
    %237 = vmatprep.subr.mxu0 0.0
    %238 = vmatpush1.msra.mxu0 %v178
    %239 = vmatprep.subr.mxu0 0.0
    %240 = vmatpush1.msra.mxu0 %v179
    %241 = vmatprep.subr.mxu0 0.0
    %242 = vmatpush1.msra.mxu0 %v180
    %243 = vmatprep.subr.mxu0 0.0
    %244 = vmatpush1.msra.mxu0 %v181
    %245 = vmatprep.subr.mxu0 0.0
    %246 = vmatpush1.msra.mxu0 %v182
    %247 = vmatprep.subr.mxu0 0.0
    %248 = vmatpush1.msra.mxu0 %v183
    %249 = vmatprep.subr.mxu0 0.0
    %250 = vmatpush1.msra.mxu0 %v184
    %251 = vmatprep.subr.mxu0 0.0
    %252 = vmatpush1.msra.mxu0 %v185
    %253 = vmatprep.subr.mxu0 0.0
    %254 = vmatpush1.msra.mxu0 %v186
    %255 = vmatprep.subr.mxu0 0.0
    %256 = vmatpush1.msra.mxu0 %v187
    %257 = vmatprep.subr.mxu0 0.0
    %258 = vmatpush1.msra.mxu0 %v188
    %259 = vmatprep.subr.mxu0 0.0
    %260 = vmatpush1.msra.mxu0 %v189
    %261 = vmatprep.mubr.f32.mxu0 %v157
    %262 = vmatmul.mubr.f32.gmra.mrb[0].mxu0 %v156
    %v263 = vpop.f32.mrb[0].mxu0
    %v264 = vadd.f32 %v195, %v263
    %v265 = vpop.f32.mrb[0].mxu0
    %266 = vdwg.mxu0
    %v267 = vlaneseq
    %v268 = vand.u32 %v267, 127
    %vm269 = vcmp.ge.s32.totalorder %v268, 0
    %vm270 = vcmp.lt.s32.totalorder %v268, 10
    %vm271 = vmand %vm269, %vm270
    %v272 = vsel %vm271, %v264, -1e+30
    %273 = vmax.xlane.f32.xlu0 %v272
    %v274 = vpop.xlane.xlu0 %273
    %v275 = vsub.f32 %v272, %v274
    %v276 = vmul.f32 %v275, 1.442695
    %v277 = vpow.pop %v276
    %278 = vadd.xlane.f32.xlu0 %v277
    %v279 = vpop.xlane.xlu0 %278
    %v280 = vrcp.pop %v279
    %v281 = vmul.f32 %v277, %v280
    %v282 = vadd.f32 %v281, 0.0
    %vm283 = vcmp.ge.s32.totalorder %v268, 10
    %vm284 = vcmp.lt.s32.totalorder %v268, 14
    %vm285 = vmand %vm283, %vm284
    %v286 = vsel %vm285, %v264, -1e+30
    %287 = vmax.xlane.f32.xlu0 %v286
    %v288 = vpop.xlane.xlu0 %287
    %v289 = vsub.f32 %v286, %v288
    %v290 = vmul.f32 %v289, 1.442695
    %v291 = vpow.pop %v290
    %292 = vadd.xlane.f32.xlu0 %v291
    %v293 = vpop.xlane.xlu0 %292
    %v294 = vrcp.pop %v293
    %v295 = vmul.f32 %v291, %v294
    %v296 = vadd.f32 %v282, %v295
    %vm297 = vcmp.ge.s32.totalorder %v268, 14
    %vm298 = vcmp.lt.s32.totalorder %v268, 16
    %vm299 = vmand %vm297, %vm298
    %v300 = vsel %vm299, %v264, -1e+30
    %301 = vmax.xlane.f32.xlu0 %v300
    %v302 = vpop.xlane.xlu0 %301
    %v303 = vsub.f32 %v300, %v302
    %v304 = vmul.f32 %v303, 1.442695
    %v305 = vpow.pop %v304
    %306 = vadd.xlane.f32.xlu0 %v305
    %v307 = vpop.xlane.xlu0 %306
    %v308 = vrcp.pop %v307
    %v309 = vmul.f32 %v305, %v308
    %v310 = vadd.f32 %v296, %v309
    %311 = vst [vmem:[#allocation8] sm:$0xff] %v310
    // Predicated region
    $region34: #{tpu_custom_call.1} parent=1 // pred_check
      _
    $region35: #{tpu_custom_call.1} parent=1 // pred_check_branch
      %313 = sbr.rel (0) target = $region37
    $region36: #{tpu_custom_call.1} parent=1 // pred_region
      %s315 = ssub.s32 128, 128
      %316 = vsyncadd [#allocation4], %s315
      %s318 = sshll.u32 [#allocation8], 4
      %s319 = int_to_ptr.vmem [resolvable:$true] %s318
      %321 = dma.vmem_to_hbm [thread:$0]  %s319, 128, %s5, [#allocation4]
    $region37: #{tpu_custom_call.1} parent=1 // pred_fallthru
      _
    // Predicated region
    $region38: #{tpu_custom_call.1} parent=1 // pred_check
      _
    $region39: #{tpu_custom_call.1} parent=1 // pred_check_branch
      %323 = sbr.rel (0) target = $region41
    $region40: #{tpu_custom_call.1} parent=1 // pred_region
      %324 = dma.done [#allocation4], 128
    $region41: #{tpu_custom_call.1} parent=1 // pred_fallthru
      _
    %325 = vsyncpa [#allocation3], 1
    %326 = vsyncpa [#allocation6], 1
    %327 = vsyncpa [#allocation4], 1

</llo_original>
